<compile_context>
chip_gen: v7x
topology: tpu7x:2x2x1
jax: 0.10.0
libtpu: 0.0.40
codegen_flags: <defaults>
</compile_context>

<pallas_src>
import jax
import jax.numpy as jnp
import numpy as np
from jax.experimental import pallas as pl
from jax.experimental.pallas import tpu as pltpu

EPS = 1e-5


def _round_up(v, m):
    return ((v + m - 1) // m) * m


def _film_kernel(x_ref, z_ref, chem_ref, w1_ref, b1_ref, w2_ref, vec_ref,
                 wgx_ref, wgz_ref, wbx_ref, wbz_ref, out_ref):
    ts = x_ref.shape[0]

    # Packed (8, D) slab rows: [b2, gc, bc, gx, bx, b_gamma, b_beta, pad]
    b2 = vec_ref[0:1, :]
    gc = vec_ref[1:2, :]
    bc = vec_ref[2:3, :]
    gx = vec_ref[3:4, :]
    bx = vec_ref[4:5, :]
    bg = vec_ref[5:6, :]
    bb = vec_ref[6:7, :]

    # ---- LayerNorm(x) over the feature dim (f32) ----
    x = x_ref[...]                                           # (ts, D)
    mu = jnp.mean(x, axis=-1, keepdims=True)
    var = jnp.mean(jnp.square(x - mu), axis=-1, keepdims=True)
    x_n = (x - mu) * jax.lax.rsqrt(var + EPS) * gx + bx

    # ---- fused chemical projection: seq & rec rows stacked on sublanes ----
    c6 = chem_ref[...]                                       # (ts, 6)
    c = jnp.concatenate([c6[:, :3], c6[:, 3:]], axis=0)      # (2*ts, 3)
    h = jnp.dot(c, w1_ref[...], preferred_element_type=jnp.float32) + b1_ref[...]
    h = jnp.maximum(h, 0.0)
    p = jnp.dot(h, w2_ref[...], preferred_element_type=jnp.float32) + b2
    pm = jnp.mean(p, axis=-1, keepdims=True)
    pv = jnp.mean(jnp.square(p - pm), axis=-1, keepdims=True)
    p_n = (p - pm) * jax.lax.rsqrt(pv + EPS) * gc + bc       # (2*ts, D)

    # z broadcast over the tile + seq_chem + rec_chem
    z_new = z_ref[...] + p_n[:ts, :] + p_n[ts:, :]           # (ts, D)

    # ---- FiLM: gamma / beta as separate lane-dense bf16 matmuls (f32 acc) ----
    xb = x_n.astype(jnp.bfloat16)
    zb = z_new.astype(jnp.bfloat16)
    gamma = (jnp.dot(xb, wgx_ref[...], preferred_element_type=jnp.float32)
             + jnp.dot(zb, wgz_ref[...], preferred_element_type=jnp.float32) + bg)
    beta = (jnp.dot(xb, wbx_ref[...], preferred_element_type=jnp.float32)
            + jnp.dot(zb, wbz_ref[...], preferred_element_type=jnp.float32) + bb)

    out_ref[...] = gamma * x_n + beta


def film_with_concatenation(x, z, chemical_features, params, *, tile_rows=256):
    """x: (B,S,D) f32, z: (B,D) f32, chemical_features: (B,S,6) f32."""
    B, S, D = x.shape
    (w1, b1, w2, b2, gc, bc, wf, bf, gx, bx) = params

    # Row tile: as large as allowed (big M for the MXU), multiple of 8, <= padded S.
    ts = _round_up(min(int(tile_rows), _round_up(S, 8)), 8)
    s_pad = _round_up(S, ts)

    x_p = x.astype(jnp.float32)
    chem_p = chemical_features.astype(jnp.float32)
    if s_pad != S:
        x_p = jnp.pad(x_p, ((0, 0), (0, s_pad - S), (0, 0)))
        chem_p = jnp.pad(chem_p, ((0, 0), (0, s_pad - S), (0, 0)))
    z3 = z.astype(jnp.float32)[:, None, :]                   # (B, 1, D)

    # Split the FiLM weight by input half (x_n vs z) AND by output columns
    # (gamma vs beta); store bf16 for the MXU (f32 accumulation in-kernel).
    wgx = wf[:D, :D].astype(jnp.bfloat16)
    wgz = wf[D:, :D].astype(jnp.bfloat16)
    wbx = wf[:D, D:].astype(jnp.bfloat16)
    wbz = wf[D:, D:].astype(jnp.bfloat16)

    # Pack the seven (1, D) vectors into a single (8, D) slab.
    vec_slab = jnp.concatenate(
        [b2, gc, bc, gx, bx, bf[:, :D], bf[:, D:],
         jnp.zeros((1, D), jnp.float32)], axis=0).astype(jnp.float32)

    grid = (B, s_pad // ts)

    def row_spec(cols):
        return pl.BlockSpec((None, ts, cols), lambda b, s: (b, s, 0))

    def const_spec(shape):
        return pl.BlockSpec(shape, lambda b, s, _n=len(shape): (0,) * _n)

    in_specs = [
        row_spec(D),                                          # x
        pl.BlockSpec((None, 1, D), lambda b, s: (b, 0, 0)),   # z (one row per batch)
        row_spec(6),                                          # chem (seq | rec)
        const_spec(w1.shape),                                 # (3, 64)
        const_spec(b1.shape),                                 # (1, 64)
        const_spec(w2.shape),                                 # (64, D)
        const_spec(vec_slab.shape),                           # (8, D)
        const_spec(wgx.shape),                                # (D, D) bf16
        const_spec(wgz.shape),
        const_spec(wbx.shape),
        const_spec(wbz.shape),
    ]

    out = pl.pallas_call(
        _film_kernel,
        out_shape=jax.ShapeDtypeStruct((B, s_pad, D), jnp.float32),
        grid_spec=pltpu.PrefetchScalarGridSpec(
            num_scalar_prefetch=0,
            grid=grid,
            in_specs=in_specs,
            out_specs=row_spec(D),
        ),
        compiler_params=pltpu.CompilerParams(
            dimension_semantics=("parallel", "parallel"),
            vmem_limit_bytes=48 * 1024 * 1024,
        ),
    )(x_p, z3, chem_p,
      w1.astype(jnp.float32), b1.astype(jnp.float32), w2.astype(jnp.float32),
      vec_slab, wgx, wgz, wbx, wbz)

    if s_pad != S:
        out = out[:, :S, :]
    return out


def make_params(key, D):
    ks = jax.random.split(key, 6)
    w1 = 0.3 * jax.random.normal(ks[0], (3, 64), jnp.float32)
    b1 = 0.1 * jax.random.normal(ks[1], (1, 64), jnp.float32)
    w2 = 0.1 * jax.random.normal(ks[2], (64, D), jnp.float32)
    b2 = 0.1 * jax.random.normal(ks[3], (1, D), jnp.float32)
    gc = jnp.ones((1, D), jnp.float32)            # chemical_proj LayerNorm weight
    bc = jnp.zeros((1, D), jnp.float32)           # chemical_proj LayerNorm bias
    wf = 0.1 * jax.random.normal(ks[4], (2 * D, 2 * D), jnp.float32)
    bf = 0.1 * jax.random.normal(ks[5], (1, 2 * D), jnp.float32)
    gx = jnp.ones((1, D), jnp.float32)            # layer_norm weight
    bx = jnp.zeros((1, D), jnp.float32)           # layer_norm bias
    return (w1, b1, w2, b2, gc, bc, wf, bf, gx, bx)


def reference(x, z, chem, params):
    (w1, b1, w2, b2, gc, bc, wf, bf, gx, bx) = params

    def ln(t, g, b):
        m = t.mean(-1, keepdims=True)
        v = ((t - m) ** 2).mean(-1, keepdims=True)
        return (t - m) / jnp.sqrt(v + EPS) * g + b

    x_n = ln(x, gx, bx)

    def proj(c):
        h = jax.nn.relu(c @ w1 + b1)
        p = h @ w2 + b2
        return ln(p, gc, bc)

    z_e = z[:, None, :] + proj(chem[..., :3]) + proj(chem[..., 3:])
    combined = jnp.concatenate([x_n, z_e], axis=-1)
    gb = combined @ wf + bf
    D = x.shape[-1]
    gamma, beta = gb[..., :D], gb[..., D:]
    return gamma * x_n + beta


if __name__ == "__main__":
    key = jax.random.PRNGKey(0)
    kx, kz, kc, kp, k2 = jax.random.split(key, 5)

    # Case 1: small shapes implied by the module (B=2, S=8, D=32).
    B, S, D = 2, 8, 32
    x = jax.random.normal(kx, (B, S, D), jnp.float32)
    z = jax.random.normal(kz, (B, D), jnp.float32)
    chem = jax.random.normal(kc, (B, S, 6), jnp.float32)
    params = make_params(kp, D)

    out = jax.block_until_ready(film_with_concatenation(x, z, chem, params))
    ref = reference(x, z, chem, params)
    np.testing.assert_allclose(np.asarray(out), np.asarray(ref),
                               rtol=5e-2, atol=5e-2)

    # Case 2: exercises S padding + multi-step 2-D grid (S not divisible by tile).
    B2, S2, D2 = 2, 100, 64
    kx2, kz2, kc2, kp2 = jax.random.split(k2, 4)
    x2 = jax.random.normal(kx2, (B2, S2, D2), jnp.float32)
    z2 = jax.random.normal(kz2, (B2, D2), jnp.float32)
    chem2 = jax.random.normal(kc2, (B2, S2, 6), jnp.float32)
    params2 = make_params(kp2, D2)
    out2 = jax.block_until_ready(
        film_with_concatenation(x2, z2, chem2, params2, tile_rows=64))
    ref2 = reference(x2, z2, chem2, params2)
    np.testing.assert_allclose(np.asarray(out2), np.asarray(ref2),
                               rtol=5e-2, atol=5e-2)

    print("KERNEL_OK")
</pallas_src>

<mosaic_0001>
module attributes {stable_mosaic.version = 11 : i64} {
  func.func @_film_kernel(%arg0: i32, %arg1: i32, %arg2: memref<1x8x32xf32, #tpu.memory_space<vmem>>, %arg3: memref<1x1x32xf32, #tpu.memory_space<vmem>>, %arg4: memref<1x8x6xf32, #tpu.memory_space<vmem>>, %arg5: memref<3x64xf32, #tpu.memory_space<vmem>>, %arg6: memref<1x64xf32, #tpu.memory_space<vmem>>, %arg7: memref<64x32xf32, #tpu.memory_space<vmem>>, %arg8: memref<8x32xf32, #tpu.memory_space<vmem>>, %arg9: memref<32x32xbf16, #tpu.memory_space<vmem>>, %arg10: memref<32x32xbf16, #tpu.memory_space<vmem>>, %arg11: memref<32x32xbf16, #tpu.memory_space<vmem>>, %arg12: memref<32x32xbf16, #tpu.memory_space<vmem>>, %arg13: memref<1x8x32xf32, #tpu.memory_space<vmem>>) attributes {dimension_semantics = [#tpu.dimension_semantics<parallel>, #tpu.dimension_semantics<parallel>], iteration_bounds = array<i64: 2, 1>, scalar_prefetch = 0 : i64, scratch_operands = 0 : i64, tpu.core_type = #tpu.core_type<tc>, window_params = [{transform_indices = @transform_0, window_bounds = array<i64: 1, 8, 32>}, {transform_indices = @transform_1, window_bounds = array<i64: 1, 1, 32>}, {transform_indices = @transform_2, window_bounds = array<i64: 1, 8, 6>}, {pipeline_mode = #tpu.pipeline_mode<synchronous>, transform_indices = @transform_3, window_bounds = array<i64: 3, 64>}, {pipeline_mode = #tpu.pipeline_mode<synchronous>, transform_indices = @transform_4, window_bounds = array<i64: 1, 64>}, {pipeline_mode = #tpu.pipeline_mode<synchronous>, transform_indices = @transform_5, window_bounds = array<i64: 64, 32>}, {pipeline_mode = #tpu.pipeline_mode<synchronous>, transform_indices = @transform_6, window_bounds = array<i64: 8, 32>}, {pipeline_mode = #tpu.pipeline_mode<synchronous>, transform_indices = @transform_7, window_bounds = array<i64: 32, 32>}, {pipeline_mode = #tpu.pipeline_mode<synchronous>, transform_indices = @transform_8, window_bounds = array<i64: 32, 32>}, {pipeline_mode = #tpu.pipeline_mode<synchronous>, transform_indices = @transform_9, window_bounds = array<i64: 32, 32>}, {pipeline_mode = #tpu.pipeline_mode<synchronous>, transform_indices = @transform_10, window_bounds = array<i64: 32, 32>}, {transform_indices = @transform_11, window_bounds = array<i64: 1, 8, 32>}]} {
    %c0 = arith.constant 0 : index
    %c0_0 = arith.constant 0 : index
    %0 = vector.load %arg8[%c0, %c0_0] : memref<8x32xf32, #tpu.memory_space<vmem>>, vector<1x32xf32>
    %c1 = arith.constant 1 : index
    %c0_1 = arith.constant 0 : index
    %1 = vector.load %arg8[%c1, %c0_1] : memref<8x32xf32, #tpu.memory_space<vmem>>, vector<1x32xf32>
    %c2 = arith.constant 2 : index
    %c0_2 = arith.constant 0 : index
    %2 = vector.load %arg8[%c2, %c0_2] : memref<8x32xf32, #tpu.memory_space<vmem>>, vector<1x32xf32>
    %c3 = arith.constant 3 : index
    %c0_3 = arith.constant 0 : index
    %3 = vector.load %arg8[%c3, %c0_3] : memref<8x32xf32, #tpu.memory_space<vmem>>, vector<1x32xf32>
    %c4 = arith.constant 4 : index
    %c0_4 = arith.constant 0 : index
    %4 = vector.load %arg8[%c4, %c0_4] : memref<8x32xf32, #tpu.memory_space<vmem>>, vector<1x32xf32>
    %c5 = arith.constant 5 : index
    %c0_5 = arith.constant 0 : index
    %5 = vector.load %arg8[%c5, %c0_5] : memref<8x32xf32, #tpu.memory_space<vmem>>, vector<1x32xf32>
    %c6 = arith.constant 6 : index
    %c0_6 = arith.constant 0 : index
    %6 = vector.load %arg8[%c6, %c0_6] : memref<8x32xf32, #tpu.memory_space<vmem>>, vector<1x32xf32>
    %c0_7 = arith.constant 0 : index
    %c0_8 = arith.constant 0 : index
    %c0_9 = arith.constant 0 : index
    %7 = vector.load %arg2[%c0_7, %c0_8, %c0_9] : memref<1x8x32xf32, #tpu.memory_space<vmem>>, vector<1x8x32xf32>
    %8 = vector.shape_cast %7 : vector<1x8x32xf32> to vector<8x32xf32>
    %cst = arith.constant dense<0.000000e+00> : vector<8xf32>
    %9 = vector.multi_reduction <add>, %8, %cst [1] : vector<8x32xf32> to vector<8xf32>
    %10 = vector.shape_cast %9 : vector<8xf32> to vector<8x1xf32>
    %cst_10 = arith.constant 3.200000e+01 : f32
    %11 = vector.broadcast %cst_10 : f32 to vector<8x1xf32>
    %12 = arith.divf %10, %11 : vector<8x1xf32>
    %13 = vector.broadcast %12 : vector<8x1xf32> to vector<8x32xf32>
    %14 = arith.subf %8, %13 : vector<8x32xf32>
    %15 = arith.mulf %14, %14 : vector<8x32xf32>
    %cst_11 = arith.constant dense<0.000000e+00> : vector<8xf32>
    %16 = vector.multi_reduction <add>, %15, %cst_11 [1] : vector<8x32xf32> to vector<8xf32>
    %17 = vector.shape_cast %16 : vector<8xf32> to vector<8x1xf32>
    %cst_12 = arith.constant 3.200000e+01 : f32
    %18 = vector.broadcast %cst_12 : f32 to vector<8x1xf32>
    %19 = arith.divf %17, %18 : vector<8x1xf32>
    %20 = vector.broadcast %12 : vector<8x1xf32> to vector<8x32xf32>
    %21 = arith.subf %8, %20 : vector<8x32xf32>
    %cst_13 = arith.constant 9.99999974E-6 : f32
    %22 = vector.broadcast %cst_13 : f32 to vector<8x1xf32>
    %23 = arith.addf %19, %22 : vector<8x1xf32>
    %24 = math.rsqrt %23 : vector<8x1xf32>
    %25 = vector.broadcast %24 : vector<8x1xf32> to vector<8x32xf32>
    %26 = arith.mulf %21, %25 : vector<8x32xf32>
    %27 = vector.broadcast %3 : vector<1x32xf32> to vector<8x32xf32>
    %28 = arith.mulf %26, %27 : vector<8x32xf32>
    %29 = vector.broadcast %4 : vector<1x32xf32> to vector<8x32xf32>
    %30 = arith.addf %28, %29 : vector<8x32xf32>
    %c0_14 = arith.constant 0 : index
    %c0_15 = arith.constant 0 : index
    %c0_16 = arith.constant 0 : index
    %31 = vector.load %arg4[%c0_14, %c0_15, %c0_16] : memref<1x8x6xf32, #tpu.memory_space<vmem>>, vector<1x8x6xf32>
    %32 = vector.shape_cast %31 : vector<1x8x6xf32> to vector<8x6xf32>
    %33 = vector.extract_strided_slice %32 {offsets = [0, 0], sizes = [8, 3], strides = [1, 1]} : vector<8x6xf32> to vector<8x3xf32>
    %34 = vector.extract_strided_slice %32 {offsets = [0, 3], sizes = [8, 3], strides = [1, 1]} : vector<8x6xf32> to vector<8x3xf32>
    %35 = tpu.concatenate %33, %34 in 0 : vector<8x3xf32>, vector<8x3xf32> -> vector<16x3xf32>
    %c0_17 = arith.constant 0 : index
    %c0_18 = arith.constant 0 : index
    %36 = vector.load %arg5[%c0_17, %c0_18] : memref<3x64xf32, #tpu.memory_space<vmem>>, vector<3x64xf32>
    %cst_19 = arith.constant dense<0.000000e+00> : vector<16x64xf32>
    %37 = tpu.matmul %35, %36, %cst_19 {dimension_numbers = #tpu.dot_dimension_numbers<[1], [0], [0], [1], [0, 0, 1, 1], [], []>} : vector<16x3xf32>, vector<3x64xf32>, vector<16x64xf32> -> vector<16x64xf32>
    %c0_20 = arith.constant 0 : index
    %c0_21 = arith.constant 0 : index
    %38 = vector.load %arg6[%c0_20, %c0_21] : memref<1x64xf32, #tpu.memory_space<vmem>>, vector<1x64xf32>
    %39 = vector.broadcast %38 : vector<1x64xf32> to vector<16x64xf32>
    %40 = arith.addf %37, %39 : vector<16x64xf32>
    %cst_22 = arith.constant 0.000000e+00 : f32
    %41 = vector.broadcast %cst_22 : f32 to vector<16x64xf32>
    %42 = arith.maximumf %40, %41 : vector<16x64xf32>
    %c0_23 = arith.constant 0 : index
    %c0_24 = arith.constant 0 : index
    %43 = vector.load %arg7[%c0_23, %c0_24] : memref<64x32xf32, #tpu.memory_space<vmem>>, vector<64x32xf32>
    %cst_25 = arith.constant dense<0.000000e+00> : vector<16x32xf32>
    %44 = tpu.matmul %42, %43, %cst_25 {dimension_numbers = #tpu.dot_dimension_numbers<[1], [0], [0], [1], [0, 0, 1, 1], [], []>} : vector<16x64xf32>, vector<64x32xf32>, vector<16x32xf32> -> vector<16x32xf32>
    %45 = vector.broadcast %0 : vector<1x32xf32> to vector<16x32xf32>
    %46 = arith.addf %44, %45 : vector<16x32xf32>
    %cst_26 = arith.constant dense<0.000000e+00> : vector<16xf32>
    %47 = vector.multi_reduction <add>, %46, %cst_26 [1] : vector<16x32xf32> to vector<16xf32>
    %48 = vector.shape_cast %47 : vector<16xf32> to vector<16x1xf32>
    %cst_27 = arith.constant 3.200000e+01 : f32
    %49 = vector.broadcast %cst_27 : f32 to vector<16x1xf32>
    %50 = arith.divf %48, %49 : vector<16x1xf32>
    %51 = vector.broadcast %50 : vector<16x1xf32> to vector<16x32xf32>
    %52 = arith.subf %46, %51 : vector<16x32xf32>
    %53 = arith.mulf %52, %52 : vector<16x32xf32>
    %cst_28 = arith.constant dense<0.000000e+00> : vector<16xf32>
    %54 = vector.multi_reduction <add>, %53, %cst_28 [1] : vector<16x32xf32> to vector<16xf32>
    %55 = vector.shape_cast %54 : vector<16xf32> to vector<16x1xf32>
    %cst_29 = arith.constant 3.200000e+01 : f32
    %56 = vector.broadcast %cst_29 : f32 to vector<16x1xf32>
    %57 = arith.divf %55, %56 : vector<16x1xf32>
    %58 = vector.broadcast %50 : vector<16x1xf32> to vector<16x32xf32>
    %59 = arith.subf %46, %58 : vector<16x32xf32>
    %cst_30 = arith.constant 9.99999974E-6 : f32
    %60 = vector.broadcast %cst_30 : f32 to vector<16x1xf32>
    %61 = arith.addf %57, %60 : vector<16x1xf32>
    %62 = math.rsqrt %61 : vector<16x1xf32>
    %63 = vector.broadcast %62 : vector<16x1xf32> to vector<16x32xf32>
    %64 = arith.mulf %59, %63 : vector<16x32xf32>
    %65 = vector.broadcast %1 : vector<1x32xf32> to vector<16x32xf32>
    %66 = arith.mulf %64, %65 : vector<16x32xf32>
    %67 = vector.broadcast %2 : vector<1x32xf32> to vector<16x32xf32>
    %68 = arith.addf %66, %67 : vector<16x32xf32>
    %c0_31 = arith.constant 0 : index
    %c0_32 = arith.constant 0 : index
    %c0_33 = arith.constant 0 : index
    %69 = vector.load %arg3[%c0_31, %c0_32, %c0_33] : memref<1x1x32xf32, #tpu.memory_space<vmem>>, vector<1x1x32xf32>
    %70 = vector.shape_cast %69 : vector<1x1x32xf32> to vector<1x32xf32>
    %71 = vector.extract_strided_slice %68 {offsets = [0, 0], sizes = [8, 32], strides = [1, 1]} : vector<16x32xf32> to vector<8x32xf32>
    %72 = vector.broadcast %70 : vector<1x32xf32> to vector<8x32xf32>
    %73 = arith.addf %72, %71 : vector<8x32xf32>
    %74 = vector.extract_strided_slice %68 {offsets = [8, 0], sizes = [8, 32], strides = [1, 1]} : vector<16x32xf32> to vector<8x32xf32>
    %75 = arith.addf %73, %74 : vector<8x32xf32>
    %76 = arith.truncf %30 : vector<8x32xf32> to vector<8x32xbf16>
    %77 = arith.truncf %75 : vector<8x32xf32> to vector<8x32xbf16>
    %c0_34 = arith.constant 0 : index
    %c0_35 = arith.constant 0 : index
    %78 = vector.load %arg9[%c0_34, %c0_35] : memref<32x32xbf16, #tpu.memory_space<vmem>>, vector<32x32xbf16>
    %cst_36 = arith.constant dense<0.000000e+00> : vector<8x32xf32>
    %79 = tpu.matmul %76, %78, %cst_36 {dimension_numbers = #tpu.dot_dimension_numbers<[1], [0], [0], [1], [0, 0, 1, 1], [], []>} : vector<8x32xbf16>, vector<32x32xbf16>, vector<8x32xf32> -> vector<8x32xf32>
    %c0_37 = arith.constant 0 : index
    %c0_38 = arith.constant 0 : index
    %80 = vector.load %arg10[%c0_37, %c0_38] : memref<32x32xbf16, #tpu.memory_space<vmem>>, vector<32x32xbf16>
    %cst_39 = arith.constant dense<0.000000e+00> : vector<8x32xf32>
    %81 = tpu.matmul %77, %80, %cst_39 {dimension_numbers = #tpu.dot_dimension_numbers<[1], [0], [0], [1], [0, 0, 1, 1], [], []>} : vector<8x32xbf16>, vector<32x32xbf16>, vector<8x32xf32> -> vector<8x32xf32>
    %82 = arith.addf %79, %81 : vector<8x32xf32>
    %83 = vector.broadcast %5 : vector<1x32xf32> to vector<8x32xf32>
    %84 = arith.addf %82, %83 : vector<8x32xf32>
    %c0_40 = arith.constant 0 : index
    %c0_41 = arith.constant 0 : index
    %85 = vector.load %arg11[%c0_40, %c0_41] : memref<32x32xbf16, #tpu.memory_space<vmem>>, vector<32x32xbf16>
    %cst_42 = arith.constant dense<0.000000e+00> : vector<8x32xf32>
    %86 = tpu.matmul %76, %85, %cst_42 {dimension_numbers = #tpu.dot_dimension_numbers<[1], [0], [0], [1], [0, 0, 1, 1], [], []>} : vector<8x32xbf16>, vector<32x32xbf16>, vector<8x32xf32> -> vector<8x32xf32>
    %c0_43 = arith.constant 0 : index
    %c0_44 = arith.constant 0 : index
    %87 = vector.load %arg12[%c0_43, %c0_44] : memref<32x32xbf16, #tpu.memory_space<vmem>>, vector<32x32xbf16>
    %cst_45 = arith.constant dense<0.000000e+00> : vector<8x32xf32>
    %88 = tpu.matmul %77, %87, %cst_45 {dimension_numbers = #tpu.dot_dimension_numbers<[1], [0], [0], [1], [0, 0, 1, 1], [], []>} : vector<8x32xbf16>, vector<32x32xbf16>, vector<8x32xf32> -> vector<8x32xf32>
    %89 = arith.addf %86, %88 : vector<8x32xf32>
    %90 = vector.broadcast %6 : vector<1x32xf32> to vector<8x32xf32>
    %91 = arith.addf %89, %90 : vector<8x32xf32>
    %92 = arith.mulf %84, %30 : vector<8x32xf32>
    %93 = arith.addf %92, %91 : vector<8x32xf32>
    %c0_46 = arith.constant 0 : index
    %c0_47 = arith.constant 0 : index
    %c0_48 = arith.constant 0 : index
    %94 = vector.load %arg13[%c0_46, %c0_47, %c0_48] : memref<1x8x32xf32, #tpu.memory_space<vmem>>, vector<1x8x32xf32>
    %95 = vector.shape_cast %94 : vector<1x8x32xf32> to vector<8x32xf32>
    %96 = vector.shape_cast %93 : vector<8x32xf32> to vector<1x8x32xf32>
    tpu.vector_store %arg13[%c0_46, %c0_47, %c0_48], %96 {strides = array<i32>} : memref<1x8x32xf32, #tpu.memory_space<vmem>>, vector<1x8x32xf32>,
    return
  }
  func.func @transform_0(%arg0: i32, %arg1: i32) -> (i32, i32, i32) {
    %c0_i32 = arith.constant 0 : i32
    %c0_i32_0 = arith.constant 0 : i32
    return %arg0, %arg1, %c0_i32 : i32, i32, i32
  }
  func.func @transform_1(%arg0: i32, %arg1: i32) -> (i32, i32, i32) {
    %c0_i32 = arith.constant 0 : i32
    %c0_i32_0 = arith.constant 0 : i32
    %c0_i32_1 = arith.constant 0 : i32
    return %arg0, %c0_i32, %c0_i32_0 : i32, i32, i32
  }
  func.func @transform_2(%arg0: i32, %arg1: i32) -> (i32, i32, i32) {
    %c0_i32 = arith.constant 0 : i32
    %c0_i32_0 = arith.constant 0 : i32
    return %arg0, %arg1, %c0_i32 : i32, i32, i32
  }
  func.func @transform_3(%arg0: i32, %arg1: i32) -> (i32, i32) {
    %c0_i32 = arith.constant 0 : i32
    %c0_i32_0 = arith.constant 0 : i32
    %c0_i32_1 = arith.constant 0 : i32
    return %c0_i32, %c0_i32_0 : i32, i32
  }
  func.func @transform_4(%arg0: i32, %arg1: i32) -> (i32, i32) {
    %c0_i32 = arith.constant 0 : i32
    %c0_i32_0 = arith.constant 0 : i32
    %c0_i32_1 = arith.constant 0 : i32
    return %c0_i32, %c0_i32_0 : i32, i32
  }
  func.func @transform_5(%arg0: i32, %arg1: i32) -> (i32, i32) {
    %c0_i32 = arith.constant 0 : i32
    %c0_i32_0 = arith.constant 0 : i32
    %c0_i32_1 = arith.constant 0 : i32
    return %c0_i32, %c0_i32_0 : i32, i32
  }
  func.func @transform_6(%arg0: i32, %arg1: i32) -> (i32, i32) {
    %c0_i32 = arith.constant 0 : i32
    %c0_i32_0 = arith.constant 0 : i32
    %c0_i32_1 = arith.constant 0 : i32
    return %c0_i32, %c0_i32_0 : i32, i32
  }
  func.func @transform_7(%arg0: i32, %arg1: i32) -> (i32, i32) {
    %c0_i32 = arith.constant 0 : i32
    %c0_i32_0 = arith.constant 0 : i32
    %c0_i32_1 = arith.constant 0 : i32
    return %c0_i32, %c0_i32_0 : i32, i32
  }
  func.func @transform_8(%arg0: i32, %arg1: i32) -> (i32, i32) {
    %c0_i32 = arith.constant 0 : i32
    %c0_i32_0 = arith.constant 0 : i32
    %c0_i32_1 = arith.constant 0 : i32
    return %c0_i32, %c0_i32_0 : i32, i32
  }
  func.func @transform_9(%arg0: i32, %arg1: i32) -> (i32, i32) {
    %c0_i32 = arith.constant 0 : i32
    %c0_i32_0 = arith.constant 0 : i32
    %c0_i32_1 = arith.constant 0 : i32
    return %c0_i32, %c0_i32_0 : i32, i32
  }
  func.func @transform_10(%arg0: i32, %arg1: i32) -> (i32, i32) {
    %c0_i32 = arith.constant 0 : i32
    %c0_i32_0 = arith.constant 0 : i32
    %c0_i32_1 = arith.constant 0 : i32
    return %c0_i32, %c0_i32_0 : i32, i32
  }
  func.func @transform_11(%arg0: i32, %arg1: i32) -> (i32, i32, i32) {
    %c0_i32 = arith.constant 0 : i32
    %c0_i32_0 = arith.constant 0 : i32
    return %arg0, %arg1, %c0_i32 : i32, i32, i32
  }
}

</mosaic_0001>

<llo_original>
// kernel: tpu_custom_call.1
$region0: #{tpu_custom_call.1}
  #allocation0 [shape = 'u32[]', space=smem, size = 0x4, offset = 0x4, fixed_abs, tag = 'smem constant byte address 0x4 - core index']
  #allocation1 [shape = 'u32[144,128]{1,0:T(1,128)}', space=vmem, size = 0x12000, scoped, tag = 'internal scratch']
  %s0 = inlined_call_operand.vmem [shape: f32[2,8,32], index: 0, kind: input, shape index: {}]
  %s1 = inlined_call_operand.vmem [shape: f32[2,1,32], index: 1, kind: input, shape index: {}]
  %s2 = inlined_call_operand.vmem [shape: f32[2,8,6], index: 2, kind: input, shape index: {}]
  %s3 = inlined_call_operand.vmem [shape: f32[3,64], index: 3, kind: input, shape index: {}]
  %s4 = inlined_call_operand.vmem [shape: f32[1,64], index: 4, kind: input, shape index: {}]
  %s5 = inlined_call_operand.vmem [shape: f32[64,32], index: 5, kind: input, shape index: {}]
  %s6 = inlined_call_operand.vmem [shape: f32[8,32], index: 6, kind: input, shape index: {}]
  %s7 = inlined_call_operand.vmem [shape: bf16[32,32], index: 7, kind: input, shape index: {}]
  %s8 = inlined_call_operand.vmem [shape: bf16[32,32], index: 8, kind: input, shape index: {}]
  %s9 = inlined_call_operand.vmem [shape: bf16[32,32], index: 9, kind: input, shape index: {}]
  %s10 = inlined_call_operand.vmem [shape: bf16[32,32], index: 10, kind: input, shape index: {}]
  %s11 = inlined_call_operand.hbm [shape: f32[2,8,32], index: 11, kind: output, shape index: {}]
  %s12 = sld [smem:[#allocation0]]
  $region77: #{tpu_custom_call.1} parent=0
    _
  %s14 = ssub.s32 1, %s12
  %s15 = scalar_select 0, %s14, %s12
  $region1: #{tpu_custom_call.1} parent=0
    #allocation2 [shape = 'u8[8192]{0}', space=vmem, size = 0x2000, scoped, tag = 'output window, operand 0']
    #allocation3 [shape = 's32[2]{0}', space=sflag, size = 0x8, scoped, tag = 'scoped memory for tpu_custom_call.1']
    %16 = vsyncpa [#allocation3], 0
    %s17 = scalar_lea.sflag [#allocation3], 1
    %18 = vsyncpa %s17, 0
    loop: start=0, step=1, limit=4
    $region2: #{tpu_custom_call.1} parent=1 // loop_pre_header
      _
    $region3: #{tpu_custom_call.1} parent=1 // loop_header
      %s20 = sphi 0, %s24
      %p21 = scmp.ge.s32.totalorder %s20, 4
      %s27 = sphi 0, %s39
      %s28 = sphi 0, %s35
      %s29 = sphi 0, %s27
      %s30 = sphi 0, %s28
      %s31 = sphi 0, %s29
      %s32 = sphi 0, %s30
      %s44 = sphi 0, %s46
      %s47 = sphi 0, %s44
      %s48 = sphi 0, %s47
      %s64 = sphi 0, %s48
      %s70 = sphi 0, %s72
      %s73 = sphi 0, %s70
      %s74 = sphi 0, %s73
      %s90 = sphi 0, %s74
      %s98 = sphi 0, %s100
      %s101 = sphi 0, %s98
      %s102 = sphi 0, %s101
      %s118 = sphi 0, %s102
      %s122 = sphi 0, %s122
      %s124 = sphi 0, %s122
      %s125 = sphi 0, %s124
      %s139 = sphi 0, %s125
      %s143 = sphi 0, %s143
      %s145 = sphi 0, %s143
      %s146 = sphi 0, %s145
      %s160 = sphi 0, %s146
      %s164 = sphi 0, %s164
      %s166 = sphi 0, %s164
      %s167 = sphi 0, %s166
      %s181 = sphi 0, %s167
      %s185 = sphi 0, %s185
      %s187 = sphi 0, %s185
      %s188 = sphi 0, %s187
      %s202 = sphi 0, %s188
      %s206 = sphi 0, %s206
      %s208 = sphi 0, %s206
      %s209 = sphi 0, %s208
      %s223 = sphi 0, %s209
      %s227 = sphi 0, %s227
      %s229 = sphi 0, %s227
      %s230 = sphi 0, %s229
      %s244 = sphi 0, %s230
      %s248 = sphi 0, %s248
      %s250 = sphi 0, %s248
      %s251 = sphi 0, %s250
      %s265 = sphi 0, %s251
      %s269 = sphi 0, %s269
      %s271 = sphi 0, %s269
      %s272 = sphi 0, %s271
      %s286 = sphi 0, %s272
      %s294 = sphi 0, %s296
      %s297 = sphi 0, %s294
      %s298 = sphi 0, %s297
      %s314 = sphi 0, %s298
    $region4: #{tpu_custom_call.1} parent=1 // loop_header_branch
      %23 = sbr.rel (%p21) target = $region8
    $region5: #{tpu_custom_call.1} parent=1 // loop_body
      %s25 = ssub.s32 %s20, 1
      %s26 = ssub.s32 %s20, 2
      %s33 = sadd.s32 1, %s28
      %p34 = scmp.ge.s32.totalorder %s33, 1
      %s35 = scalar_select %p34, 0, %s33
      %s36 = sadd.s32 1, %s27
      %s37 = scalar_select %p34, %s36, %s27
      %p38 = scmp.ge.s32.totalorder %s37, 2
      %s39 = scalar_select %p38, 0, %s37
      %s40 = ssub.s32 %s27, %s39
      %s41 = ssub.s32 %s28, %s35
      %s42 = sor.u32 %s40, %s41
      %p43 = scmp.eq.s32.totalorder %s42, 0
      %s45 = sadd.s32 %s44, 1
      %s46 = scalar_select %p43, %s44, %s45
      %p49 = pneg %p43
      %p50 = scmp.eq.s32.totalorder %s20, 1
      %p51 = por %p49, %p50
      %p52 = scmp.ne.s32.totalorder %s44, %s47
      %p53 = scmp.eq.s32.totalorder %s20, 0
      %p54 = por %p52, %p53
      %p55 = scmp.ne.s32.totalorder %s44, %s47
      %p56 = scmp.eq.s32.totalorder %s25, 1
      %p57 = por %p55, %p56
      %p58 = scmp.ne.s32.totalorder %s47, %s48
      %p59 = scmp.eq.s32.totalorder %s25, 0
      %p60 = por %p58, %p59
      %p61 = scmp.ne.s32.totalorder %s47, %s48
      %p62 = scmp.eq.s32.totalorder %s26, 1
      %p63 = por %p61, %p62
      %p65 = scmp.ne.s32.totalorder %s48, %s64
      %p66 = scmp.eq.s32.totalorder %s26, 0
      %p67 = por %p65, %p66
      %s68 = ssub.s32 %s27, %s39
      %p69 = scmp.eq.s32.totalorder %s68, 0
      %s71 = sadd.s32 %s70, 1
      %s72 = scalar_select %p69, %s70, %s71
      %p75 = pneg %p69
      %p76 = scmp.eq.s32.totalorder %s20, 1
      %p77 = por %p75, %p76
      %p78 = scmp.ne.s32.totalorder %s70, %s73
      %p79 = scmp.eq.s32.totalorder %s20, 0
      %p80 = por %p78, %p79
      %p81 = scmp.ne.s32.totalorder %s70, %s73
      %p82 = scmp.eq.s32.totalorder %s25, 1
      %p83 = por %p81, %p82
      %p84 = scmp.ne.s32.totalorder %s73, %s74
      %p85 = scmp.eq.s32.totalorder %s25, 0
      %p86 = por %p84, %p85
      %p87 = scmp.ne.s32.totalorder %s73, %s74
      %p88 = scmp.eq.s32.totalorder %s26, 1
      %p89 = por %p87, %p88
      %p91 = scmp.ne.s32.totalorder %s74, %s90
      %p92 = scmp.eq.s32.totalorder %s26, 0
      %p93 = por %p91, %p92
      %s94 = ssub.s32 %s27, %s39
      %s95 = ssub.s32 %s28, %s35
      %s96 = sor.u32 %s94, %s95
      %p97 = scmp.eq.s32.totalorder %s96, 0
      %s99 = sadd.s32 %s98, 1
      %s100 = scalar_select %p97, %s98, %s99
      %p103 = pneg %p97
      %p104 = scmp.eq.s32.totalorder %s20, 1
      %p105 = por %p103, %p104
      %p106 = scmp.ne.s32.totalorder %s98, %s101
      %p107 = scmp.eq.s32.totalorder %s20, 0
      %p108 = por %p106, %p107
      %p109 = scmp.ne.s32.totalorder %s98, %s101
      %p110 = scmp.eq.s32.totalorder %s25, 1
      %p111 = por %p109, %p110
      %p112 = scmp.ne.s32.totalorder %s101, %s102
      %p113 = scmp.eq.s32.totalorder %s25, 0
      %p114 = por %p112, %p113
      %p115 = scmp.ne.s32.totalorder %s101, %s102
      %p116 = scmp.eq.s32.totalorder %s26, 1
      %p117 = por %p115, %p116
      %p119 = scmp.ne.s32.totalorder %s102, %s118
      %p120 = scmp.eq.s32.totalorder %s26, 0
      %p121 = por %p119, %p120
      %s123 = sadd.s32 %s122, 1
      %p126 = scmp.eq.s32.totalorder %s20, 1
      %p127 = scmp.ne.s32.totalorder %s122, %s124
      %p128 = scmp.eq.s32.totalorder %s20, 0
      %p129 = por %p127, %p128
      %p130 = scmp.ne.s32.totalorder %s122, %s124
      %p131 = scmp.eq.s32.totalorder %s25, 1
      %p132 = por %p130, %p131
      %p133 = scmp.ne.s32.totalorder %s124, %s125
      %p134 = scmp.eq.s32.totalorder %s25, 0
      %p135 = por %p133, %p134
      %p136 = scmp.ne.s32.totalorder %s124, %s125
      %p137 = scmp.eq.s32.totalorder %s26, 1
      %p138 = por %p136, %p137
      %p140 = scmp.ne.s32.totalorder %s125, %s139
      %p141 = scmp.eq.s32.totalorder %s26, 0
      %p142 = por %p140, %p141
      %s144 = sadd.s32 %s143, 1
      %p147 = scmp.eq.s32.totalorder %s20, 1
      %p148 = scmp.ne.s32.totalorder %s143, %s145
      %p149 = scmp.eq.s32.totalorder %s20, 0
      %p150 = por %p148, %p149
      %p151 = scmp.ne.s32.totalorder %s143, %s145
      %p152 = scmp.eq.s32.totalorder %s25, 1
      %p153 = por %p151, %p152
      %p154 = scmp.ne.s32.totalorder %s145, %s146
      %p155 = scmp.eq.s32.totalorder %s25, 0
      %p156 = por %p154, %p155
      %p157 = scmp.ne.s32.totalorder %s145, %s146
      %p158 = scmp.eq.s32.totalorder %s26, 1
      %p159 = por %p157, %p158
      %p161 = scmp.ne.s32.totalorder %s146, %s160
      %p162 = scmp.eq.s32.totalorder %s26, 0
      %p163 = por %p161, %p162
      %s165 = sadd.s32 %s164, 1
      %p168 = scmp.eq.s32.totalorder %s20, 1
      %p169 = scmp.ne.s32.totalorder %s164, %s166
      %p170 = scmp.eq.s32.totalorder %s20, 0
      %p171 = por %p169, %p170
      %p172 = scmp.ne.s32.totalorder %s164, %s166
      %p173 = scmp.eq.s32.totalorder %s25, 1
      %p174 = por %p172, %p173
      %p175 = scmp.ne.s32.totalorder %s166, %s167
      %p176 = scmp.eq.s32.totalorder %s25, 0
      %p177 = por %p175, %p176
      %p178 = scmp.ne.s32.totalorder %s166, %s167
      %p179 = scmp.eq.s32.totalorder %s26, 1
      %p180 = por %p178, %p179
      %p182 = scmp.ne.s32.totalorder %s167, %s181
      %p183 = scmp.eq.s32.totalorder %s26, 0
      %p184 = por %p182, %p183
      %s186 = sadd.s32 %s185, 1
      %p189 = scmp.eq.s32.totalorder %s20, 1
      %p190 = scmp.ne.s32.totalorder %s185, %s187
      %p191 = scmp.eq.s32.totalorder %s20, 0
      %p192 = por %p190, %p191
      %p193 = scmp.ne.s32.totalorder %s185, %s187
      %p194 = scmp.eq.s32.totalorder %s25, 1
      %p195 = por %p193, %p194
      %p196 = scmp.ne.s32.totalorder %s187, %s188
      %p197 = scmp.eq.s32.totalorder %s25, 0
      %p198 = por %p196, %p197
      %p199 = scmp.ne.s32.totalorder %s187, %s188
      %p200 = scmp.eq.s32.totalorder %s26, 1
      %p201 = por %p199, %p200
      %p203 = scmp.ne.s32.totalorder %s188, %s202
      %p204 = scmp.eq.s32.totalorder %s26, 0
      %p205 = por %p203, %p204
      %s207 = sadd.s32 %s206, 1
      %p210 = scmp.eq.s32.totalorder %s20, 1
      %p211 = scmp.ne.s32.totalorder %s206, %s208
      %p212 = scmp.eq.s32.totalorder %s20, 0
      %p213 = por %p211, %p212
      %p214 = scmp.ne.s32.totalorder %s206, %s208
      %p215 = scmp.eq.s32.totalorder %s25, 1
      %p216 = por %p214, %p215
      %p217 = scmp.ne.s32.totalorder %s208, %s209
      %p218 = scmp.eq.s32.totalorder %s25, 0
      %p219 = por %p217, %p218
      %p220 = scmp.ne.s32.totalorder %s208, %s209
      %p221 = scmp.eq.s32.totalorder %s26, 1
      %p222 = por %p220, %p221
      %p224 = scmp.ne.s32.totalorder %s209, %s223
      %p225 = scmp.eq.s32.totalorder %s26, 0
      %p226 = por %p224, %p225
      %s228 = sadd.s32 %s227, 1
      %p231 = scmp.eq.s32.totalorder %s20, 1
      %p232 = scmp.ne.s32.totalorder %s227, %s229
      %p233 = scmp.eq.s32.totalorder %s20, 0
      %p234 = por %p232, %p233
      %p235 = scmp.ne.s32.totalorder %s227, %s229
      %p236 = scmp.eq.s32.totalorder %s25, 1
      %p237 = por %p235, %p236
      %p238 = scmp.ne.s32.totalorder %s229, %s230
      %p239 = scmp.eq.s32.totalorder %s25, 0
      %p240 = por %p238, %p239
      %p241 = scmp.ne.s32.totalorder %s229, %s230
      %p242 = scmp.eq.s32.totalorder %s26, 1
      %p243 = por %p241, %p242
      %p245 = scmp.ne.s32.totalorder %s230, %s244
      %p246 = scmp.eq.s32.totalorder %s26, 0
      %p247 = por %p245, %p246
      %s249 = sadd.s32 %s248, 1
      %p252 = scmp.eq.s32.totalorder %s20, 1
      %p253 = scmp.ne.s32.totalorder %s248, %s250
      %p254 = scmp.eq.s32.totalorder %s20, 0
      %p255 = por %p253, %p254
      %p256 = scmp.ne.s32.totalorder %s248, %s250
      %p257 = scmp.eq.s32.totalorder %s25, 1
      %p258 = por %p256, %p257
      %p259 = scmp.ne.s32.totalorder %s250, %s251
      %p260 = scmp.eq.s32.totalorder %s25, 0
      %p261 = por %p259, %p260
      %p262 = scmp.ne.s32.totalorder %s250, %s251
      %p263 = scmp.eq.s32.totalorder %s26, 1
      %p264 = por %p262, %p263
      %p266 = scmp.ne.s32.totalorder %s251, %s265
      %p267 = scmp.eq.s32.totalorder %s26, 0
      %p268 = por %p266, %p267
      %s270 = sadd.s32 %s269, 1
      %p273 = scmp.eq.s32.totalorder %s20, 1
      %p274 = scmp.ne.s32.totalorder %s269, %s271
      %p275 = scmp.eq.s32.totalorder %s20, 0
      %p276 = por %p274, %p275
      %p277 = scmp.ne.s32.totalorder %s269, %s271
      %p278 = scmp.eq.s32.totalorder %s25, 1
      %p279 = por %p277, %p278
      %p280 = scmp.ne.s32.totalorder %s271, %s272
      %p281 = scmp.eq.s32.totalorder %s25, 0
      %p282 = por %p280, %p281
      %p283 = scmp.ne.s32.totalorder %s271, %s272
      %p284 = scmp.eq.s32.totalorder %s26, 1
      %p285 = por %p283, %p284
      %p287 = scmp.ne.s32.totalorder %s272, %s286
      %p288 = scmp.eq.s32.totalorder %s26, 0
      %p289 = por %p287, %p288
      %s290 = ssub.s32 %s27, %s39
      %s291 = ssub.s32 %s28, %s35
      %s292 = sor.u32 %s290, %s291
      %p293 = scmp.eq.s32.totalorder %s292, 0
      %s295 = sadd.s32 %s294, 1
      %s296 = scalar_select %p293, %s294, %s295
      %p299 = pneg %p293
      %p300 = scmp.eq.s32.totalorder %s20, 1
      %p301 = por %p299, %p300
      %p302 = scmp.ne.s32.totalorder %s294, %s297
      %p303 = scmp.eq.s32.totalorder %s20, 0
      %p304 = por %p302, %p303
      %p305 = scmp.ne.s32.totalorder %s294, %s297
      %p306 = scmp.eq.s32.totalorder %s25, 1
      %p307 = por %p305, %p306
      %p308 = scmp.ne.s32.totalorder %s297, %s298
      %p309 = scmp.eq.s32.totalorder %s25, 0
      %p310 = por %p308, %p309
      %p311 = scmp.ne.s32.totalorder %s297, %s298
      %p312 = scmp.eq.s32.totalorder %s26, 1
      %p313 = por %p311, %p312
      %p315 = scmp.ne.s32.totalorder %s298, %s314
      %p316 = scmp.eq.s32.totalorder %s26, 0
      %p317 = por %p315, %p316
      %p318 = scmp.le.s32.totalorder 1, %s20
      %p319 = scmp.lt.s32.totalorder %s20, 3
      %p320 = pnand %p318, %p319
      %p321 = pneg %p320
      // Predicated region
      $region9: #{tpu_custom_call.1} parent=5 // pred_check
        _
      $region10: #{tpu_custom_call.1} parent=5 // pred_check_branch
        %323 = sbr.rel (%p320) target = $region12
      $region11: #{tpu_custom_call.1} parent=5 // pred_region
        %s324 = ssub.s32 %s20, 1
        // Predicated region
        $region13: #{tpu_custom_call.1} parent=11 // pred_check
          %p325 = pneg %p135
        $region14: #{tpu_custom_call.1} parent=11 // pred_check_branch
          %327 = sbr.rel (%p325) target = $region16
        $region15: #{tpu_custom_call.1} parent=11 // pred_region
          _
        $region16: #{tpu_custom_call.1} parent=11 // pred_fallthru
          _
        // Predicated region
        $region17: #{tpu_custom_call.1} parent=11 // pred_check
          %p328 = pneg %p156
        $region18: #{tpu_custom_call.1} parent=11 // pred_check_branch
          %330 = sbr.rel (%p328) target = $region20
        $region19: #{tpu_custom_call.1} parent=11 // pred_region
          _
        $region20: #{tpu_custom_call.1} parent=11 // pred_fallthru
          _
        // Predicated region
        $region21: #{tpu_custom_call.1} parent=11 // pred_check
          %p331 = pneg %p177
        $region22: #{tpu_custom_call.1} parent=11 // pred_check_branch
          %333 = sbr.rel (%p331) target = $region24
        $region23: #{tpu_custom_call.1} parent=11 // pred_region
          _
        $region24: #{tpu_custom_call.1} parent=11 // pred_fallthru
          _
        // Predicated region
        $region25: #{tpu_custom_call.1} parent=11 // pred_check
          %p334 = pneg %p198
        $region26: #{tpu_custom_call.1} parent=11 // pred_check_branch
          %336 = sbr.rel (%p334) target = $region28
        $region27: #{tpu_custom_call.1} parent=11 // pred_region
          _
        $region28: #{tpu_custom_call.1} parent=11 // pred_fallthru
          _
        // Predicated region
        $region29: #{tpu_custom_call.1} parent=11 // pred_check
          %p337 = pneg %p219
        $region30: #{tpu_custom_call.1} parent=11 // pred_check_branch
          %339 = sbr.rel (%p337) target = $region32
        $region31: #{tpu_custom_call.1} parent=11 // pred_region
          _
        $region32: #{tpu_custom_call.1} parent=11 // pred_fallthru
          _
        // Predicated region
        $region33: #{tpu_custom_call.1} parent=11 // pred_check
          %p340 = pneg %p240
        $region34: #{tpu_custom_call.1} parent=11 // pred_check_branch
          %342 = sbr.rel (%p340) target = $region36
        $region35: #{tpu_custom_call.1} parent=11 // pred_region
          _
        $region36: #{tpu_custom_call.1} parent=11 // pred_fallthru
          _
        // Predicated region
        $region37: #{tpu_custom_call.1} parent=11 // pred_check
          %p343 = pneg %p261
        $region38: #{tpu_custom_call.1} parent=11 // pred_check_branch
          %345 = sbr.rel (%p343) target = $region40
        $region39: #{tpu_custom_call.1} parent=11 // pred_region
          _
        $region40: #{tpu_custom_call.1} parent=11 // pred_fallthru
          _
        // Predicated region
        $region41: #{tpu_custom_call.1} parent=11 // pred_check
          %p346 = pneg %p282
        $region42: #{tpu_custom_call.1} parent=11 // pred_check_branch
          %348 = sbr.rel (%p346) target = $region44
        $region43: #{tpu_custom_call.1} parent=11 // pred_region
          _
        $region44: #{tpu_custom_call.1} parent=11 // pred_fallthru
          _
      $region12: #{tpu_custom_call.1} parent=5 // pred_fallthru
        _
      %p349 = scmp.lt.s32.totalorder %s20, 2
      // Predicated region
      $region45: #{tpu_custom_call.1} parent=5 // pred_check
        %p350 = pneg %p349
      $region46: #{tpu_custom_call.1} parent=5 // pred_check_branch
        %352 = sbr.rel (%p350) target = $region48
      $region47: #{tpu_custom_call.1} parent=5 // pred_region
        // Predicated region
        $region49: #{tpu_custom_call.1} parent=47 // pred_check
          %p353 = pneg %p54
        $region50: #{tpu_custom_call.1} parent=47 // pred_check_branch
          %355 = sbr.rel (%p353) target = $region52
        $region51: #{tpu_custom_call.1} parent=47 // pred_region
          %p356 = scmp.lt.s32.totalorder %s27, 1
          %s357 = scalar_select %p356, %s27, 1
          %p358 = scmp.lt.s32.totalorder %s28, 0
          %s359 = scalar_select %p358, %s28, 0
          %s360 = sadd.s32 %s359, %s357
          %s361 = smul.addr %s360, 8
          %s362 = scalar_lea.vmem %s0, %s361
        $region52: #{tpu_custom_call.1} parent=47 // pred_fallthru
          _
        // Predicated region
        $region53: #{tpu_custom_call.1} parent=47 // pred_check
          %p363 = pneg %p80
        $region54: #{tpu_custom_call.1} parent=47 // pred_check_branch
          %365 = sbr.rel (%p363) target = $region56
        $region55: #{tpu_custom_call.1} parent=47 // pred_region
          %p366 = scmp.lt.s32.totalorder %s27, 1
          %s367 = scalar_select %p366, %s27, 1
          %s368 = scalar_lea.vmem %s1, %s367
        $region56: #{tpu_custom_call.1} parent=47 // pred_fallthru
          _
        // Predicated region
        $region57: #{tpu_custom_call.1} parent=47 // pred_check
          %p369 = pneg %p108
        $region58: #{tpu_custom_call.1} parent=47 // pred_check_branch
          %371 = sbr.rel (%p369) target = $region60
        $region59: #{tpu_custom_call.1} parent=47 // pred_region
          %p372 = scmp.lt.s32.totalorder %s27, 1
          %s373 = scalar_select %p372, %s27, 1
          %p374 = scmp.lt.s32.totalorder %s28, 0
          %s375 = scalar_select %p374, %s28, 0
          %s376 = sadd.s32 %s375, %s373
          %s377 = smul.addr %s376, 8
          %s378 = scalar_lea.vmem %s2, %s377
        $region60: #{tpu_custom_call.1} parent=47 // pred_fallthru
          _
      $region48: #{tpu_custom_call.1} parent=5 // pred_fallthru
        _
      %p379 = scmp.le.s32.totalorder 1, %s20
      %p380 = scmp.lt.s32.totalorder %s20, 3
      %p381 = pnand %p379, %p380
      %p382 = pneg %p381
      // Predicated region
      $region61: #{tpu_custom_call.1} parent=5 // pred_check
        _
      $region62: #{tpu_custom_call.1} parent=5 // pred_check_branch
        %384 = sbr.rel (%p381) target = $region64
      $region63: #{tpu_custom_call.1} parent=5 // pred_region
        %s385 = ssub.s32 %s20, 1
        %p386 = scmp.lt.s32.totalorder %s29, 1
        %s387 = scalar_select %p386, %s29, 1
        %p388 = scmp.lt.s32.totalorder %s30, 0
        %s389 = scalar_select %p388, %s30, 0
        %s390 = sadd.s32 %s389, %s387
        %s391 = smul.addr %s390, 8
        %s392 = scalar_lea.vmem %s0, %s391
        %p393 = pneg %p60
        %p394 = pneg %p57
        %p395 = scmp.lt.s32.totalorder %s29, 1
        %s396 = scalar_select %p395, %s29, 1
        %s397 = scalar_lea.vmem %s1, %s396
        %p398 = pneg %p86
        %p399 = pneg %p83
        %p400 = scmp.lt.s32.totalorder %s29, 1
        %s401 = scalar_select %p400, %s29, 1
        %p402 = scmp.lt.s32.totalorder %s30, 0
        %s403 = scalar_select %p402, %s30, 0
        %s404 = sadd.s32 %s403, %s401
        %s405 = smul.addr %s404, 8
        %s406 = scalar_lea.vmem %s2, %s405
        %p407 = pneg %p114
        %p408 = pneg %p111
        %p409 = pneg %p135
        %p410 = pneg %p132
        %p411 = pneg %p156
        %p412 = pneg %p153
        %p413 = pneg %p177
        %p414 = pneg %p174
        %p415 = pneg %p198
        %p416 = pneg %p195
        %p417 = pneg %p219
        %p418 = pneg %p216
        %p419 = pneg %p240
        %p420 = pneg %p237
        %p421 = pneg %p261
        %p422 = pneg %p258
        %p423 = pneg %p282
        %p424 = pneg %p279
        %p425 = pneg %p310
        %p426 = pneg %p307
        %s427 = sand.u32 %s297, 1
        %s428 = scalar_lea.sflag [#allocation3], %s427
        %s429 = sand.u32 %s297, 1
        %s430 = smul.addr %s429, 8
        %s431 = scalar_lea.vmem [#allocation2], %s430
        %p432 = scmp.lt.s32.totalorder %s29, 1
        %s433 = scalar_select %p432, %s29, 1
        %p434 = scmp.lt.s32.totalorder %s30, 0
        %s435 = scalar_select %p434, %s30, 0
        %s436 = sadd.s32 %s435, %s433
        %s437 = smul.addr %s436, 8
        %s438 = scalar_lea.vmem %s0, %s437
        %p439 = scmp.lt.s32.totalorder %s29, 1
        %s440 = scalar_select %p439, %s29, 1
        %s441 = scalar_lea.vmem %s1, %s440
        %p442 = scmp.lt.s32.totalorder %s29, 1
        %s443 = scalar_select %p442, %s29, 1
        %p444 = scmp.lt.s32.totalorder %s30, 0
        %s445 = scalar_select %p444, %s30, 0
        %s446 = sadd.s32 %s445, %s443
        %s447 = smul.addr %s446, 8
        %s448 = scalar_lea.vmem %s2, %s447
        %v450 = vld [vmem:[%s6] sm:$0x1]
        %v451 = vld [vmem:[%s6 + $0x1] sm:$0x1]
        %v452 = vld [vmem:[%s6 + $0x2] sm:$0x1]
        %v453 = vld [vmem:[%s6 + $0x3] sm:$0x1]
        %v454 = vld [vmem:[%s6 + $0x4] sm:$0x1]
        %v455 = vld [vmem:[%s6 + $0x5] sm:$0x1]
        %v456 = vld [vmem:[%s6 + $0x6] sm:$0x1]
        %v457 = vld [vmem:[%s438] sm:$0xff]
        %vm458 = vcmask 261120
        %v459 = vsel %vm458, %v457, 0.0
        %460 = vadd.xlane.f32.xlu0 %v459
        %v461 = vpop.xlane.xlu0 %460
        %v462 = vrcp.pop 32.0
        %v463 = vmul.f32 %v461, %v462
        %v464 = vsub.f32 %v457, %v463
        %v465 = vmul.f32 %v464, %v464
        %v466 = vsel %vm458, %v465, 0.0
        %467 = vadd.xlane.f32.xlu0 %v466
        %v468 = vpop.xlane.xlu0 %467
        %v469 = vmul.f32 %v468, %v462
        %v470 = vadd.f32 %v469, 1e-05
        %v471 = vrsqrt.pop %v470
        %v472 = vmul.f32 %v464, %v471
        %v473 = vlaneseq
        %v474 = vshrl.u32 %v473, 7
        %v475 = vsub.s32 0, %v474
        %v476 = vrot.slane %v453, %v475
        %v477 = vmul.f32 %v472, %v476
        %v478 = vlaneseq
        %v479 = vshrl.u32 %v478, 7
        %v480 = vsub.s32 0, %v479
        %v481 = vrot.slane %v454, %v480
        %v482 = vadd.f32 %v477, %v481
        %v483 = vld [vmem:[%s448] sm:$0xff]
        %485 = vrot.lane.b32.xlu0 %v483, 125
        %v486 = vpop.permute.xlu0 %485
        %v487 = vld [vmem:[%s3] sm:$0x7]
        %v488 = vld [vmem:[%s4] sm:$0x1]
        %v490 = vlaneseq
        %v491 = vshrl.u32 %v490, 7
        %v492 = vsub.s32 0, %v491
        %v493 = vrot.slane %v488, %v492
        %vm495 = vcmask 23552
        %v496 = vsel %vm495, %v483, 0
        %v498 = vsel %vm495, %v486, 0
        %vm500 = vcmask 1042432
        %v502 = vsel %vm500, %v487, 0
        %504 = vmatprep.subr.mxu0 0.0
        %505 = vmatpush1.msra.mxu0 %v502
        %506 = vmatprep.subr.mxu0 0.0
        %507 = vmatpush1.msra.mxu0 0.0
        %508 = vmatprep.subr.mxu0 0.0
        %509 = vmatpush1.msra.mxu0 0.0
        %510 = vmatprep.subr.mxu0 0.0
        %511 = vmatpush1.msra.mxu0 0.0
        %512 = vmatprep.subr.mxu0 0.0
        %513 = vmatpush1.msra.mxu0 0.0
        %514 = vmatprep.subr.mxu0 0.0
        %515 = vmatpush1.msra.mxu0 0.0
        %516 = vmatprep.subr.mxu0 0.0
        %517 = vmatpush1.msra.mxu0 0.0
        %518 = vmatprep.subr.mxu0 0.0
        %519 = vmatpush1.msra.mxu0 0.0
        %520 = vmatprep.subr.mxu0 0.0
        %521 = vmatpush1.msra.mxu0 0.0
        %522 = vmatprep.subr.mxu0 0.0
        %523 = vmatpush1.msra.mxu0 0.0
        %524 = vmatprep.subr.mxu0 0.0
        %525 = vmatpush1.msra.mxu0 0.0
        %526 = vmatprep.subr.mxu0 0.0
        %527 = vmatpush1.msra.mxu0 0.0
        %528 = vmatprep.subr.mxu0 0.0
        %529 = vmatpush1.msra.mxu0 0.0
        %530 = vmatprep.subr.mxu0 0.0
        %531 = vmatpush1.msra.mxu0 0.0
        %532 = vmatprep.subr.mxu0 0.0
        %533 = vmatpush1.msra.mxu0 0.0
        %534 = vmatprep.subr.mxu0 0.0
        %535 = vmatpush1.msra.mxu0 0.0
        %536 = vmatprep.subr.mxu0 0.0
        %537 = vmatpush1.msra.mxu0 0.0
        %538 = vmatprep.subr.mxu0 0.0
        %539 = vmatpush1.msra.mxu0 0.0
        %540 = vmatprep.subr.mxu0 0.0
        %541 = vmatpush1.msra.mxu0 0.0
        %542 = vmatprep.subr.mxu0 0.0
        %543 = vmatpush1.msra.mxu0 0.0
        %544 = vmatprep.subr.mxu0 0.0
        %545 = vmatpush1.msra.mxu0 0.0
        %546 = vmatprep.subr.mxu0 0.0
        %547 = vmatpush1.msra.mxu0 0.0
        %548 = vmatprep.subr.mxu0 0.0
        %549 = vmatpush1.msra.mxu0 0.0
        %550 = vmatprep.subr.mxu0 0.0
        %551 = vmatpush1.msra.mxu0 0.0
        %552 = vmatprep.subr.mxu0 0.0
        %553 = vmatpush1.msra.mxu0 0.0
        %554 = vmatprep.subr.mxu0 0.0
        %555 = vmatpush1.msra.mxu0 0.0
        %556 = vmatprep.subr.mxu0 0.0
        %557 = vmatpush1.msra.mxu0 0.0
        %558 = vmatprep.subr.mxu0 0.0
        %559 = vmatpush1.msra.mxu0 0.0
        %560 = vmatprep.subr.mxu0 0.0
        %561 = vmatpush1.msra.mxu0 0.0
        %562 = vmatprep.subr.mxu0 0.0
        %563 = vmatpush1.msra.mxu0 0.0
        %564 = vmatprep.subr.mxu0 0.0
        %565 = vmatpush1.msra.mxu0 0.0
        %566 = vmatprep.subr.mxu0 0.0
        %567 = vmatpush1.msra.mxu0 0.0
        %568 = vmatprep.mubr.f32.mxu0 0.0
        %569 = vmatmul.mubr.f32.gmra.mrb[0].mxu0 %v496
        %v570 = vpop.f32.mrb[0].mxu0
        %v571 = vadd.f32 %v493, %v570
        %v572 = vpop.f32.mrb[0].mxu0
        %573 = vmatprep.mubr.f32.mxu0 0.0
        %574 = vmatmul.mubr.f32.gmra.mrb[0].mxu0 %v498
        %v575 = vpop.f32.mrb[0].mxu0
        %v576 = vadd.f32 %v493, %v575
        %v577 = vpop.f32.mrb[0].mxu0
        %578 = vdwg.mxu0
        %v579 = vmax.f32 %v571, 0.0
        %v580 = vmax.f32 %v576, 0.0
        %v581 = vld [vmem:[%s5] sm:$0xff]
        %v582 = vld [vmem:[%s5 + $0x8] sm:$0xff]
        %v583 = vld [vmem:[%s5 + $0x10] sm:$0xff]
        %v584 = vld [vmem:[%s5 + $0x18] sm:$0xff]
        %v585 = vld [vmem:[%s5 + $0x20] sm:$0xff]
        %v586 = vld [vmem:[%s5 + $0x28] sm:$0xff]
        %v587 = vld [vmem:[%s5 + $0x30] sm:$0xff]
        %v588 = vld [vmem:[%s5 + $0x38] sm:$0xff]
        %v589 = vlaneseq
        %v590 = vshrl.u32 %v589, 7
        %v591 = vsub.s32 0, %v590
        %v592 = vrot.slane %v450, %v591
        %vm593 = vcmask 523264
        %v595 = vsel %vm593, %v579, 0
        %v598 = vsel %vm593, %v580, 0
        %600 = vmatprep.subr.mxu0 0.0
        %601 = vmatpush1.msra.mxu0 %v581
        %602 = vmatprep.subr.mxu0 0.0
        %603 = vmatpush1.msra.mxu0 %v582
        %604 = vmatprep.subr.mxu0 0.0
        %605 = vmatpush1.msra.mxu0 %v583
        %606 = vmatprep.subr.mxu0 0.0
        %607 = vmatpush1.msra.mxu0 %v584
        %608 = vmatprep.subr.mxu0 0.0
        %609 = vmatpush1.msra.mxu0 %v585
        %610 = vmatprep.subr.mxu0 0.0
        %611 = vmatpush1.msra.mxu0 %v586
        %612 = vmatprep.subr.mxu0 0.0
        %613 = vmatpush1.msra.mxu0 %v587
        %614 = vmatprep.subr.mxu0 0.0
        %615 = vmatpush1.msra.mxu0 %v588
        %616 = vmatprep.subr.mxu0 0.0
        %617 = vmatpush1.msra.mxu0 0.0
        %618 = vmatprep.subr.mxu0 0.0
        %619 = vmatpush1.msra.mxu0 0.0
        %620 = vmatprep.subr.mxu0 0.0
        %621 = vmatpush1.msra.mxu0 0.0
        %622 = vmatprep.subr.mxu0 0.0
        %623 = vmatpush1.msra.mxu0 0.0
        %624 = vmatprep.subr.mxu0 0.0
        %625 = vmatpush1.msra.mxu0 0.0
        %626 = vmatprep.subr.mxu0 0.0
        %627 = vmatpush1.msra.mxu0 0.0
        %628 = vmatprep.subr.mxu0 0.0
        %629 = vmatpush1.msra.mxu0 0.0
        %630 = vmatprep.subr.mxu0 0.0
        %631 = vmatpush1.msra.mxu0 0.0
        %632 = vmatprep.subr.mxu0 0.0
        %633 = vmatpush1.msra.mxu0 0.0
        %634 = vmatprep.subr.mxu0 0.0
        %635 = vmatpush1.msra.mxu0 0.0
        %636 = vmatprep.subr.mxu0 0.0
        %637 = vmatpush1.msra.mxu0 0.0
        %638 = vmatprep.subr.mxu0 0.0
        %639 = vmatpush1.msra.mxu0 0.0
        %640 = vmatprep.subr.mxu0 0.0
        %641 = vmatpush1.msra.mxu0 0.0
        %642 = vmatprep.subr.mxu0 0.0
        %643 = vmatpush1.msra.mxu0 0.0
        %644 = vmatprep.subr.mxu0 0.0
        %645 = vmatpush1.msra.mxu0 0.0
        %646 = vmatprep.subr.mxu0 0.0
        %647 = vmatpush1.msra.mxu0 0.0
        %648 = vmatprep.subr.mxu0 0.0
        %649 = vmatpush1.msra.mxu0 0.0
        %650 = vmatprep.subr.mxu0 0.0
        %651 = vmatpush1.msra.mxu0 0.0
        %652 = vmatprep.subr.mxu0 0.0
        %653 = vmatpush1.msra.mxu0 0.0
        %654 = vmatprep.subr.mxu0 0.0
        %655 = vmatpush1.msra.mxu0 0.0
        %656 = vmatprep.subr.mxu0 0.0
        %657 = vmatpush1.msra.mxu0 0.0
        %658 = vmatprep.subr.mxu0 0.0
        %659 = vmatpush1.msra.mxu0 0.0
        %660 = vmatprep.subr.mxu0 0.0
        %661 = vmatpush1.msra.mxu0 0.0
        %662 = vmatprep.subr.mxu0 0.0
        %663 = vmatpush1.msra.mxu0 0.0
        %664 = vmatprep.mubr.f32.mxu0 0.0
        %665 = vmatmul.mubr.f32.gmra.mrb[0].mxu0 %v595
        %v666 = vpop.f32.mrb[0].mxu0
        %v667 = vadd.f32 %v592, %v666
        %v668 = vpop.f32.mrb[0].mxu0
        %669 = vmatprep.mubr.f32.mxu0 0.0
        %670 = vmatmul.mubr.f32.gmra.mrb[0].mxu0 %v598
        %v671 = vpop.f32.mrb[0].mxu0
        %v672 = vadd.f32 %v592, %v671
        %v673 = vpop.f32.mrb[0].mxu0
        %674 = vdwg.mxu0
        %v675 = vsel %vm458, %v667, 0.0
        %676 = vadd.xlane.f32.xlu0 %v675
        %v677 = vpop.xlane.xlu0 %676
        %v678 = vsel %vm458, %v672, 0.0
        %679 = vadd.xlane.f32.xlu0 %v678
        %v680 = vpop.xlane.xlu0 %679
        %v681 = vmul.f32 %v677, %v462
        %v682 = vmul.f32 %v680, %v462
        %v683 = vsub.f32 %v667, %v681
        %v684 = vsub.f32 %v672, %v682
        %v685 = vmul.f32 %v683, %v683
        %v686 = vmul.f32 %v684, %v684
        %v687 = vsel %vm458, %v685, 0.0
        %688 = vadd.xlane.f32.xlu0 %v687
        %v689 = vpop.xlane.xlu0 %688
        %v690 = vsel %vm458, %v686, 0.0
        %691 = vadd.xlane.f32.xlu0 %v690
        %v692 = vpop.xlane.xlu0 %691
        %v693 = vmul.f32 %v689, %v462
        %v694 = vmul.f32 %v692, %v462
        %v695 = vadd.f32 %v693, 1e-05
        %v696 = vadd.f32 %v694, 1e-05
        %v697 = vrsqrt.pop %v695
        %v698 = vrsqrt.pop %v696
        %v699 = vmul.f32 %v683, %v697
        %v700 = vmul.f32 %v684, %v698
        %v701 = vlaneseq
        %v702 = vshrl.u32 %v701, 7
        %v703 = vsub.s32 0, %v702
        %v704 = vrot.slane %v451, %v703
        %v705 = vmul.f32 %v699, %v704
        %v706 = vmul.f32 %v700, %v704
        %v707 = vlaneseq
        %v708 = vshrl.u32 %v707, 7
        %v709 = vsub.s32 0, %v708
        %v710 = vrot.slane %v452, %v709
        %v711 = vadd.f32 %v705, %v710
        %v712 = vadd.f32 %v706, %v710
        %v713 = vld [vmem:[%s441] sm:$0x1]
        %v715 = vlaneseq
        %v716 = vshrl.u32 %v715, 7
        %v717 = vsub.s32 0, %v716
        %v718 = vrot.slane %v713, %v717
        %v720 = vadd.f32 %v718, %v711
        %v721 = vadd.f32 %v720, %v712
        %v722 = vpack.c.bf16 %v482, %v482
        %v723 = vpack.c.bf16 %v721, %v721
        %v724 = vld [vmem:[%s7] sm:$0xf]
        %v725 = vld [vmem:[%s7 + $0x4] sm:$0xf]
        %v726 = vld [vmem:[%s7 + $0x8] sm:$0xf]
        %v727 = vld [vmem:[%s7 + $0xc] sm:$0xf]
        %v728 = vld [vmem:[%s8] sm:$0xf]
        %v729 = vld [vmem:[%s8 + $0x4] sm:$0xf]
        %v730 = vld [vmem:[%s8 + $0x8] sm:$0xf]
        %v731 = vld [vmem:[%s8 + $0xc] sm:$0xf]
        %v736 = vunpack.c.l.b16 %v728
        %v737 = vunpack.c.l.b16 %v729
        %v738 = vunpack.c.l.b16 %v730
        %v739 = vunpack.c.l.b16 %v731
        %v740 = vpack.c.b16 %v737, %v736
        %v741 = vpack.c.b16 %v739, %v738
        %v745 = vsel %vm458, %v723, 0
        %747 = vmatprep.subr.bf16.mxu0 0
        %748 = vmatpush1.bf16.msra.mxu0 %v740
        %749 = vmatprep.subr.bf16.mxu0 0
        %750 = vmatpush1.bf16.msra.mxu0 %v741
        %751 = vmatprep.subr.bf16.mxu0 0
        %752 = vmatpush1.bf16.msra.mxu0 0
        %753 = vmatprep.subr.bf16.mxu0 0
        %754 = vmatpush1.bf16.msra.mxu0 0
        %755 = vmatprep.subr.bf16.mxu0 0
        %756 = vmatpush1.bf16.msra.mxu0 0
        %757 = vmatprep.subr.bf16.mxu0 0
        %758 = vmatpush1.bf16.msra.mxu0 0
        %759 = vmatprep.subr.bf16.mxu0 0
        %760 = vmatpush1.bf16.msra.mxu0 0
        %761 = vmatprep.subr.bf16.mxu0 0
        %762 = vmatpush1.bf16.msra.mxu0 0
        %763 = vmatprep.subr.bf16.mxu0 0
        %764 = vmatpush1.bf16.msra.mxu0 0
        %765 = vmatprep.subr.bf16.mxu0 0
        %766 = vmatpush1.bf16.msra.mxu0 0
        %767 = vmatprep.subr.bf16.mxu0 0
        %768 = vmatpush1.bf16.msra.mxu0 0
        %769 = vmatprep.subr.bf16.mxu0 0
        %770 = vmatpush1.bf16.msra.mxu0 0
        %771 = vmatprep.subr.bf16.mxu0 0
        %772 = vmatpush1.bf16.msra.mxu0 0
        %773 = vmatprep.subr.bf16.mxu0 0
        %774 = vmatpush1.bf16.msra.mxu0 0
        %775 = vmatprep.subr.bf16.mxu0 0
        %776 = vmatpush1.bf16.msra.mxu0 0
        %777 = vmatprep.subr.bf16.mxu0 0
        %778 = vmatpush1.bf16.msra.mxu0 0
        %779 = vmatprep.mubr.bf16.mxu0 0
        %780 = vmatmul.mubr.bf16.gmra.mrb[0].mxu0 %v745
        %v781 = vpop.f32.mrb[0].mxu0
        %v782 = vadd.f32 0.0, %v781
        %v783 = vpop.f32.mrb[0].mxu0
        %v784 = vpop.f32.mrb[0].mxu0
        %v785 = vpop.f32.mrb[0].mxu0
        %786 = vdwg.mxu0
        %v791 = vunpack.c.l.b16 %v724
        %v792 = vunpack.c.l.b16 %v725
        %v793 = vunpack.c.l.b16 %v726
        %v794 = vunpack.c.l.b16 %v727
        %v795 = vpack.c.b16 %v792, %v791
        %v796 = vpack.c.b16 %v794, %v793
        %v800 = vsel %vm458, %v722, 0
        %802 = vmatprep.subr.bf16.mxu0 0
        %803 = vmatpush1.bf16.msra.mxu0 %v795
        %804 = vmatprep.subr.bf16.mxu0 0
        %805 = vmatpush1.bf16.msra.mxu0 %v796
        %806 = vmatprep.subr.bf16.mxu0 0
        %807 = vmatpush1.bf16.msra.mxu0 0
        %808 = vmatprep.subr.bf16.mxu0 0
        %809 = vmatpush1.bf16.msra.mxu0 0
        %810 = vmatprep.subr.bf16.mxu0 0
        %811 = vmatpush1.bf16.msra.mxu0 0
        %812 = vmatprep.subr.bf16.mxu0 0
        %813 = vmatpush1.bf16.msra.mxu0 0
        %814 = vmatprep.subr.bf16.mxu0 0
        %815 = vmatpush1.bf16.msra.mxu0 0
        %816 = vmatprep.subr.bf16.mxu0 0
        %817 = vmatpush1.bf16.msra.mxu0 0
        %818 = vmatprep.subr.bf16.mxu0 0
        %819 = vmatpush1.bf16.msra.mxu0 0
        %820 = vmatprep.subr.bf16.mxu0 0
        %821 = vmatpush1.bf16.msra.mxu0 0
        %822 = vmatprep.subr.bf16.mxu0 0
        %823 = vmatpush1.bf16.msra.mxu0 0
        %824 = vmatprep.subr.bf16.mxu0 0
        %825 = vmatpush1.bf16.msra.mxu0 0
        %826 = vmatprep.subr.bf16.mxu0 0
        %827 = vmatpush1.bf16.msra.mxu0 0
        %828 = vmatprep.subr.bf16.mxu0 0
        %829 = vmatpush1.bf16.msra.mxu0 0
        %830 = vmatprep.subr.bf16.mxu0 0
        %831 = vmatpush1.bf16.msra.mxu0 0
        %832 = vmatprep.subr.bf16.mxu0 0
        %833 = vmatpush1.bf16.msra.mxu0 0
        %834 = vmatprep.mubr.bf16.mxu0 0
        %835 = vmatmul.mubr.bf16.gmra.mrb[0].mxu0 %v800
        %v836 = vpop.f32.mrb[0].mxu0
        %v837 = vadd.f32 %v782, %v836
        %v838 = vpop.f32.mrb[0].mxu0
        %v839 = vpop.f32.mrb[0].mxu0
        %v840 = vpop.f32.mrb[0].mxu0
        %841 = vdwg.mxu0
        %v842 = vlaneseq
        %v843 = vshrl.u32 %v842, 7
        %v844 = vsub.s32 0, %v843
        %v845 = vrot.slane %v455, %v844
        %v846 = vadd.f32 %v837, %v845
        %v847 = vld [vmem:[%s9] sm:$0xf]
        %v848 = vld [vmem:[%s9 + $0x4] sm:$0xf]
        %v849 = vld [vmem:[%s9 + $0x8] sm:$0xf]
        %v850 = vld [vmem:[%s9 + $0xc] sm:$0xf]
        %v851 = vld [vmem:[%s10] sm:$0xf]
        %v852 = vld [vmem:[%s10 + $0x4] sm:$0xf]
        %v853 = vld [vmem:[%s10 + $0x8] sm:$0xf]
        %v854 = vld [vmem:[%s10 + $0xc] sm:$0xf]
        %v859 = vunpack.c.l.b16 %v851
        %v860 = vunpack.c.l.b16 %v852
        %v861 = vunpack.c.l.b16 %v853
        %v862 = vunpack.c.l.b16 %v854
        %v863 = vpack.c.b16 %v860, %v859
        %v864 = vpack.c.b16 %v862, %v861
        %867 = vmatprep.subr.bf16.mxu0 0
        %868 = vmatpush1.bf16.msra.mxu0 %v863
        %869 = vmatprep.subr.bf16.mxu0 0
        %870 = vmatpush1.bf16.msra.mxu0 %v864
        %871 = vmatprep.subr.bf16.mxu0 0
        %872 = vmatpush1.bf16.msra.mxu0 0
        %873 = vmatprep.subr.bf16.mxu0 0
        %874 = vmatpush1.bf16.msra.mxu0 0
        %875 = vmatprep.subr.bf16.mxu0 0
        %876 = vmatpush1.bf16.msra.mxu0 0
        %877 = vmatprep.subr.bf16.mxu0 0
        %878 = vmatpush1.bf16.msra.mxu0 0
        %879 = vmatprep.subr.bf16.mxu0 0
        %880 = vmatpush1.bf16.msra.mxu0 0
        %881 = vmatprep.subr.bf16.mxu0 0
        %882 = vmatpush1.bf16.msra.mxu0 0
        %883 = vmatprep.subr.bf16.mxu0 0
        %884 = vmatpush1.bf16.msra.mxu0 0
        %885 = vmatprep.subr.bf16.mxu0 0
        %886 = vmatpush1.bf16.msra.mxu0 0
        %887 = vmatprep.subr.bf16.mxu0 0
        %888 = vmatpush1.bf16.msra.mxu0 0
        %889 = vmatprep.subr.bf16.mxu0 0
        %890 = vmatpush1.bf16.msra.mxu0 0
        %891 = vmatprep.subr.bf16.mxu0 0
        %892 = vmatpush1.bf16.msra.mxu0 0
        %893 = vmatprep.subr.bf16.mxu0 0
        %894 = vmatpush1.bf16.msra.mxu0 0
        %895 = vmatprep.subr.bf16.mxu0 0
        %896 = vmatpush1.bf16.msra.mxu0 0
        %897 = vmatprep.subr.bf16.mxu0 0
        %898 = vmatpush1.bf16.msra.mxu0 0
        %899 = vmatprep.mubr.bf16.mxu0 0
        %900 = vmatmul.mubr.bf16.gmra.mrb[0].mxu0 %v745
        %v901 = vpop.f32.mrb[0].mxu0
        %v902 = vadd.f32 0.0, %v901
        %v903 = vpop.f32.mrb[0].mxu0
        %v904 = vpop.f32.mrb[0].mxu0
        %v905 = vpop.f32.mrb[0].mxu0
        %906 = vdwg.mxu0
        %v911 = vunpack.c.l.b16 %v847
        %v912 = vunpack.c.l.b16 %v848
        %v913 = vunpack.c.l.b16 %v849
        %v914 = vunpack.c.l.b16 %v850
        %v915 = vpack.c.b16 %v912, %v911
        %v916 = vpack.c.b16 %v914, %v913
        %919 = vmatprep.subr.bf16.mxu0 0
        %920 = vmatpush1.bf16.msra.mxu0 %v915
        %921 = vmatprep.subr.bf16.mxu0 0
        %922 = vmatpush1.bf16.msra.mxu0 %v916
        %923 = vmatprep.subr.bf16.mxu0 0
        %924 = vmatpush1.bf16.msra.mxu0 0
        %925 = vmatprep.subr.bf16.mxu0 0
        %926 = vmatpush1.bf16.msra.mxu0 0
        %927 = vmatprep.subr.bf16.mxu0 0
        %928 = vmatpush1.bf16.msra.mxu0 0
        %929 = vmatprep.subr.bf16.mxu0 0
        %930 = vmatpush1.bf16.msra.mxu0 0
        %931 = vmatprep.subr.bf16.mxu0 0
        %932 = vmatpush1.bf16.msra.mxu0 0
        %933 = vmatprep.subr.bf16.mxu0 0
        %934 = vmatpush1.bf16.msra.mxu0 0
        %935 = vmatprep.subr.bf16.mxu0 0
        %936 = vmatpush1.bf16.msra.mxu0 0
        %937 = vmatprep.subr.bf16.mxu0 0
        %938 = vmatpush1.bf16.msra.mxu0 0
        %939 = vmatprep.subr.bf16.mxu0 0
        %940 = vmatpush1.bf16.msra.mxu0 0
        %941 = vmatprep.subr.bf16.mxu0 0
        %942 = vmatpush1.bf16.msra.mxu0 0
        %943 = vmatprep.subr.bf16.mxu0 0
        %944 = vmatpush1.bf16.msra.mxu0 0
        %945 = vmatprep.subr.bf16.mxu0 0
        %946 = vmatpush1.bf16.msra.mxu0 0
        %947 = vmatprep.subr.bf16.mxu0 0
        %948 = vmatpush1.bf16.msra.mxu0 0
        %949 = vmatprep.subr.bf16.mxu0 0
        %950 = vmatpush1.bf16.msra.mxu0 0
        %951 = vmatprep.mubr.bf16.mxu0 0
        %952 = vmatmul.mubr.bf16.gmra.mrb[0].mxu0 %v800
        %v953 = vpop.f32.mrb[0].mxu0
        %v954 = vadd.f32 %v902, %v953
        %v955 = vpop.f32.mrb[0].mxu0
        %v956 = vpop.f32.mrb[0].mxu0
        %v957 = vpop.f32.mrb[0].mxu0
        %958 = vdwg.mxu0
        %v959 = vlaneseq
        %v960 = vshrl.u32 %v959, 7
        %v961 = vsub.s32 0, %v960
        %v962 = vrot.slane %v456, %v961
        %v963 = vadd.f32 %v954, %v962
        %v964 = vmul.f32 %v846, %v482
        %v965 = vadd.f32 %v964, %v963
        %966 = vst.msk [vmem:[%s431] sm:$0xff] %vm458, %v965
        %s967 = sand.u32 %s297, 1
        %s968 = scalar_lea.sflag [#allocation3], %s967
        %s969 = sand.u32 %s297, 1
        %s970 = smul.addr %s969, 8
        %s971 = scalar_lea.vmem [#allocation2], %s970
        // Predicated region
        $region65: #{tpu_custom_call.1} parent=63 // pred_check
          %p972 = pneg %p307
        $region66: #{tpu_custom_call.1} parent=63 // pred_check_branch
          %974 = sbr.rel (%p972) target = $region68
        $region67: #{tpu_custom_call.1} parent=63 // pred_region
          %s976 = ssub.s32 128, 128
          %977 = vsyncadd %s968, %s976
          %s978 = sadd.s32 %s30, %s29
          %s979 = smul.addr %s978, 128
          %s980 = scalar_lea.hbm %s11, %s979
          %s982 = sshll.u32 %s971, 4
          %s983 = int_to_ptr.vmem [resolvable:$true] %s982
          %985 = dma.vmem_to_hbm [thread:$0]  %s983, 128, %s980, %s968
        $region68: #{tpu_custom_call.1} parent=63 // pred_fallthru
          _
      $region64: #{tpu_custom_call.1} parent=5 // pred_fallthru
        _
      %p986 = scmp.le.s32.totalorder 2, %s20
      // Predicated region
      $region69: #{tpu_custom_call.1} parent=5 // pred_check
        %p987 = pneg %p986
      $region70: #{tpu_custom_call.1} parent=5 // pred_check_branch
        %989 = sbr.rel (%p987) target = $region72
      $region71: #{tpu_custom_call.1} parent=5 // pred_region
        %s990 = ssub.s32 %s20, 2
        // Predicated region
        $region73: #{tpu_custom_call.1} parent=71 // pred_check
          %p991 = pneg %p313
        $region74: #{tpu_custom_call.1} parent=71 // pred_check_branch
          %993 = sbr.rel (%p991) target = $region76
        $region75: #{tpu_custom_call.1} parent=71 // pred_region
          %s994 = sand.u32 %s298, 1
          %s995 = scalar_lea.sflag [#allocation3], %s994
          %s996 = sand.u32 %s298, 1
          %s997 = smul.addr %s996, 8
          %s998 = scalar_lea.vmem [#allocation2], %s997
          %999 = dma.done %s995, 128
        $region76: #{tpu_custom_call.1} parent=71 // pred_fallthru
          _
      $region72: #{tpu_custom_call.1} parent=5 // pred_fallthru
        _
    $region6: #{tpu_custom_call.1} parent=1 // loop_footer
      %s24 = sadd.s32 1, %s20
    $region7: #{tpu_custom_call.1} parent=1 // loop_footer_branch
      %19 = sbr.rel target = $region3
    $region8: #{tpu_custom_call.1} parent=1 // loop_exit
      _
    %1000 = vsyncpa [#allocation3], 1
    %s1001 = scalar_lea.sflag [#allocation3], 1
    %1002 = vsyncpa %s1001, 1

</llo_original>
